<compile_context>
chip_gen: v5e
topology: v5e:2x2
jax: 0.10.0
libtpu: 0.0.40
codegen_flags: <defaults>
</compile_context>

<pallas_src>
import jax
import jax.numpy as jnp
from jax.experimental import pallas as pl
from jax.experimental.pallas import tpu as pltpu


def _round_up(n, m):
    return ((n + m - 1) // m) * m


def mlp_logsoftmax_kernel(x_ref, w1_ref, b1_ref, w2_ref, b2_ref,
                          w3_ref, b3_ref, o_ref):
    # cast the streamed x tile to bf16 in-kernel (free under DMA slack)
    x = x_ref[...].astype(jnp.bfloat16)

    # linear1 (bf16 x bf16 -> f32 accumulate) + ReLU
    h1 = jnp.dot(x, w1_ref[...], preferred_element_type=jnp.float32) + b1_ref[...]
    h1 = jnp.maximum(h1, 0.0)

    # linear2 + sigmoid (tanh identity -> single EUP op, exact)
    h2 = jnp.dot(h1.astype(jnp.bfloat16), w2_ref[...],
                 preferred_element_type=jnp.float32) + b2_ref[...]
    h2 = 0.5 * (jnp.tanh(0.5 * h2) + 1.0)

    # linear3 (true label_num output width; padded w3 rows are zero -> exact)
    h3 = jnp.dot(h2.astype(jnp.bfloat16), w3_ref[...],
                 preferred_element_type=jnp.float32) + b3_ref[...]

    # numerically-stable log_softmax over the last dim (f32)
    m = jnp.max(h3, axis=-1, keepdims=True)
    s = h3 - m
    lse = jnp.log(jnp.sum(jnp.exp(s), axis=-1, keepdims=True))
    o_ref[...] = (s - lse).astype(o_ref.dtype)


def neuralnet_2_forward(x, params, *, tb=2048):
    """x: [B, total_embedding_size] f32; params: (w1,b1,w2,b2,w3,b3) with
    weights stored [in, out] and biases [1, out]."""
    w1, b1, w2, b2, w3, b3 = params
    B, d_in = x.shape
    label_num = w3.shape[1]

    # lane-friendly hidden widths (exact zero padding)
    h1p = _round_up(w1.shape[1], 128)   # 100 -> 128
    h2p = _round_up(w2.shape[1], 128)   # 50  -> 128

    # weight prep: tiny, one-time, stays resident in VMEM across grid steps
    w1_bf = jnp.pad(w1, ((0, 0), (0, h1p - w1.shape[1]))).astype(jnp.bfloat16)
    b1_f = jnp.pad(b1.astype(jnp.float32), ((0, 0), (0, h1p - b1.shape[1])))
    w2_bf = jnp.pad(w2, ((0, h1p - w2.shape[0]),
                         (0, h2p - w2.shape[1]))).astype(jnp.bfloat16)
    b2_f = jnp.pad(b2.astype(jnp.float32), ((0, 0), (0, h2p - b2.shape[1])))
    # padded h2 lanes are sigmoid(0)=0.5, but the padded rows of w3 are zero,
    # so they contribute nothing -> math stays exact.
    w3_bf = jnp.pad(w3, ((0, h2p - w3.shape[0]), (0, 0))).astype(jnp.bfloat16)
    b3_f = b3.astype(jnp.float32)

    # batch tile: large (amortize per-step overhead), multiple of 8 sublanes,
    # and >=2 grid steps whenever the batch allows it (v7x megacore split).
    tb = max(8, min(int(tb), _round_up(B, 8)))
    tb = _round_up(tb, 8)
    if pl.cdiv(B, tb) < 2 and B >= 16:
        tb = _round_up(pl.cdiv(B, 2), 8)
    b_pad = pl.cdiv(B, tb) * tb

    x_in = x
    if b_pad != B:
        # NOTE: extra HBM pass over x; only fires when B is not a multiple of
        # the batch tile.  TODO(synk): mask the tail tile in-kernel instead.
        x_in = jnp.pad(x, ((0, b_pad - B), (0, 0)))

    def resident(arr):  # same block every step -> DMA'd once, stays in VMEM
        return pl.BlockSpec(arr.shape, lambda i: (0, 0))

    out = pl.pallas_call(
        mlp_logsoftmax_kernel,
        out_shape=jax.ShapeDtypeStruct((b_pad, label_num), jnp.float32),
        grid=(b_pad // tb,),
        in_specs=[
            pl.BlockSpec((tb, d_in), lambda i: (i, 0)),   # x: streamed per tile
            resident(w1_bf), resident(b1_f),
            resident(w2_bf), resident(b2_f),
            resident(w3_bf), resident(b3_f),
        ],
        out_specs=pl.BlockSpec((tb, label_num), lambda i: (i, 0)),
        compiler_params=pltpu.CompilerParams(
            dimension_semantics=("parallel",)),
    )(x_in, w1_bf, b1_f, w2_bf, b2_f, w3_bf, b3_f)

    return out if b_pad == B else out[:B]


def neuralnet_2_reference(x, params):
    w1, b1, w2, b2, w3, b3 = params
    h1 = jnp.maximum(x @ w1 + b1, 0.0)
    h2 = jax.nn.sigmoid(h1 @ w2 + b2)
    return jax.nn.log_softmax(h2 @ w3 + b3, axis=-1)


def init_params(key, total_embedding_size, label_num):
    """Deterministic PyTorch-Linear-style init (uniform +/- 1/sqrt(fan_in))."""
    dims = [(total_embedding_size, 100), (100, 50), (50, label_num)]
    params = []
    for (fan_in, fan_out) in dims:
        key, kw, kb = jax.random.split(key, 3)
        bound = 1.0 / jnp.sqrt(float(fan_in))
        w = jax.random.uniform(kw, (fan_in, fan_out), jnp.float32, -bound, bound)
        b = jax.random.uniform(kb, (1, fan_out), jnp.float32, -bound, bound)
        params += [w, b]
    return params, key


if __name__ == "__main__":
    # small, forward-consistent shapes
    batch = 8
    total_embedding_size = 32
    label_num = 8
    embedding_size = 16
    text_vocab, issue_vocab = 64, 48  # stand-ins for the word dicts

    key = jax.random.PRNGKey(0)
    params, key = init_params(key, total_embedding_size, label_num)

    # Embedding tables exist in __init__ but are unused by forward().
    key, kt, ki, kx = jax.random.split(key, 4)
    _text_embedding = jax.random.normal(kt, (text_vocab, embedding_size), jnp.float32)
    _issue_embedding = jax.random.normal(ki, (issue_vocab, embedding_size), jnp.float32)

    x = jax.random.normal(kx, (batch, total_embedding_size), jnp.float32)

    out = neuralnet_2_forward(x, params)
    out = jax.block_until_ready(out)

    # sanity: log_softmax rows should sum (in prob space) to ~1
    row_sums = jnp.sum(jnp.exp(out), axis=-1)
    assert out.shape == (batch, label_num)
    assert bool(jnp.all(jnp.abs(row_sums - 1.0) < 1e-3))

    # loose check vs. a pure-JAX f32 reference (kernel uses bf16 matmul inputs)
    ref = neuralnet_2_reference(x, params)
    assert bool(jnp.max(jnp.abs(out - ref)) < 5e-2)

    print("KERNEL_OK")
</pallas_src>

<mosaic_0001>
module attributes {stable_mosaic.version = 11 : i64} {
  func.func @mlp_logsoftmax_kernel(%arg0: i32, %arg1: memref<8x32xf32, #tpu.memory_space<vmem>>, %arg2: memref<32x128xbf16, #tpu.memory_space<vmem>>, %arg3: memref<1x128xf32, #tpu.memory_space<vmem>>, %arg4: memref<128x128xbf16, #tpu.memory_space<vmem>>, %arg5: memref<1x128xf32, #tpu.memory_space<vmem>>, %arg6: memref<128x8xbf16, #tpu.memory_space<vmem>>, %arg7: memref<1x8xf32, #tpu.memory_space<vmem>>, %arg8: memref<8x8xf32, #tpu.memory_space<vmem>>) attributes {dimension_semantics = [#tpu.dimension_semantics<parallel>], iteration_bounds = array<i64: 1>, scalar_prefetch = 0 : i64, scratch_operands = 0 : i64, tpu.core_type = #tpu.core_type<tc>, window_params = [{transform_indices = @transform_0, window_bounds = array<i64: 8, 32>}, {pipeline_mode = #tpu.pipeline_mode<synchronous>, transform_indices = @transform_1, window_bounds = array<i64: 32, 128>}, {pipeline_mode = #tpu.pipeline_mode<synchronous>, transform_indices = @transform_2, window_bounds = array<i64: 1, 128>}, {pipeline_mode = #tpu.pipeline_mode<synchronous>, transform_indices = @transform_3, window_bounds = array<i64: 128, 128>}, {pipeline_mode = #tpu.pipeline_mode<synchronous>, transform_indices = @transform_4, window_bounds = array<i64: 1, 128>}, {pipeline_mode = #tpu.pipeline_mode<synchronous>, transform_indices = @transform_5, window_bounds = array<i64: 128, 8>}, {pipeline_mode = #tpu.pipeline_mode<synchronous>, transform_indices = @transform_6, window_bounds = array<i64: 1, 8>}, {transform_indices = @transform_7, window_bounds = array<i64: 8, 8>}]} {
    %c0 = arith.constant 0 : index
    %c0_0 = arith.constant 0 : index
    %0 = vector.load %arg1[%c0, %c0_0] : memref<8x32xf32, #tpu.memory_space<vmem>>, vector<8x32xf32>
    %1 = arith.truncf %0 : vector<8x32xf32> to vector<8x32xbf16>
    %c0_1 = arith.constant 0 : index
    %c0_2 = arith.constant 0 : index
    %2 = vector.load %arg2[%c0_1, %c0_2] : memref<32x128xbf16, #tpu.memory_space<vmem>>, vector<32x128xbf16>
    %cst = arith.constant dense<0.000000e+00> : vector<8x128xf32>
    %3 = tpu.matmul %1, %2, %cst {dimension_numbers = #tpu.dot_dimension_numbers<[1], [0], [0], [1], [0, 0, 1, 1], [], []>} : vector<8x32xbf16>, vector<32x128xbf16>, vector<8x128xf32> -> vector<8x128xf32>
    %c0_3 = arith.constant 0 : index
    %c0_4 = arith.constant 0 : index
    %4 = vector.load %arg3[%c0_3, %c0_4] : memref<1x128xf32, #tpu.memory_space<vmem>>, vector<1x128xf32>
    %5 = vector.broadcast %4 : vector<1x128xf32> to vector<8x128xf32>
    %6 = arith.addf %3, %5 : vector<8x128xf32>
    %cst_5 = arith.constant 0.000000e+00 : f32
    %7 = vector.broadcast %cst_5 : f32 to vector<8x128xf32>
    %8 = arith.maximumf %6, %7 : vector<8x128xf32>
    %9 = arith.truncf %8 : vector<8x128xf32> to vector<8x128xbf16>
    %c0_6 = arith.constant 0 : index
    %c0_7 = arith.constant 0 : index
    %10 = vector.load %arg4[%c0_6, %c0_7] : memref<128x128xbf16, #tpu.memory_space<vmem>>, vector<128x128xbf16>
    %cst_8 = arith.constant dense<0.000000e+00> : vector<8x128xf32>
    %11 = tpu.matmul %9, %10, %cst_8 {dimension_numbers = #tpu.dot_dimension_numbers<[1], [0], [0], [1], [0, 0, 1, 1], [], []>} : vector<8x128xbf16>, vector<128x128xbf16>, vector<8x128xf32> -> vector<8x128xf32>
    %c0_9 = arith.constant 0 : index
    %c0_10 = arith.constant 0 : index
    %12 = vector.load %arg5[%c0_9, %c0_10] : memref<1x128xf32, #tpu.memory_space<vmem>>, vector<1x128xf32>
    %13 = vector.broadcast %12 : vector<1x128xf32> to vector<8x128xf32>
    %14 = arith.addf %11, %13 : vector<8x128xf32>
    %cst_11 = arith.constant 5.000000e-01 : f32
    %15 = vector.broadcast %cst_11 : f32 to vector<8x128xf32>
    %16 = arith.mulf %15, %14 : vector<8x128xf32>
    %17 = math.tanh %16 : vector<8x128xf32>
    %cst_12 = arith.constant 1.000000e+00 : f32
    %18 = vector.broadcast %cst_12 : f32 to vector<8x128xf32>
    %19 = arith.addf %17, %18 : vector<8x128xf32>
    %cst_13 = arith.constant 5.000000e-01 : f32
    %20 = vector.broadcast %cst_13 : f32 to vector<8x128xf32>
    %21 = arith.mulf %20, %19 : vector<8x128xf32>
    %22 = arith.truncf %21 : vector<8x128xf32> to vector<8x128xbf16>
    %c0_14 = arith.constant 0 : index
    %c0_15 = arith.constant 0 : index
    %23 = vector.load %arg6[%c0_14, %c0_15] : memref<128x8xbf16, #tpu.memory_space<vmem>>, vector<128x8xbf16>
    %cst_16 = arith.constant dense<0.000000e+00> : vector<8x8xf32>
    %24 = tpu.matmul %22, %23, %cst_16 {dimension_numbers = #tpu.dot_dimension_numbers<[1], [0], [0], [1], [0, 0, 1, 1], [], []>} : vector<8x128xbf16>, vector<128x8xbf16>, vector<8x8xf32> -> vector<8x8xf32>
    %c0_17 = arith.constant 0 : index
    %c0_18 = arith.constant 0 : index
    %25 = vector.load %arg7[%c0_17, %c0_18] : memref<1x8xf32, #tpu.memory_space<vmem>>, vector<1x8xf32>
    %26 = vector.broadcast %25 : vector<1x8xf32> to vector<8x8xf32>
    %27 = arith.addf %24, %26 : vector<8x8xf32>
    %cst_19 = arith.constant dense<0xFF800000> : vector<8xf32>
    %28 = vector.multi_reduction <maximumf>, %27, %cst_19 [1] : vector<8x8xf32> to vector<8xf32>
    %29 = vector.shape_cast %28 : vector<8xf32> to vector<8x1xf32>
    %30 = vector.broadcast %29 : vector<8x1xf32> to vector<8x8xf32>
    %31 = arith.subf %27, %30 : vector<8x8xf32>
    %32 = math.exp %31 : vector<8x8xf32>
    %cst_20 = arith.constant dense<0.000000e+00> : vector<8xf32>
    %33 = vector.multi_reduction <add>, %32, %cst_20 [1] : vector<8x8xf32> to vector<8xf32>
    %34 = vector.shape_cast %33 : vector<8xf32> to vector<8x1xf32>
    %35 = math.log %34 : vector<8x1xf32>
    %36 = vector.broadcast %35 : vector<8x1xf32> to vector<8x8xf32>
    %37 = arith.subf %31, %36 : vector<8x8xf32>
    %c0_21 = arith.constant 0 : index
    %c0_22 = arith.constant 0 : index
    %38 = vector.load %arg8[%c0_21, %c0_22] : memref<8x8xf32, #tpu.memory_space<vmem>>, vector<8x8xf32>
    tpu.vector_store %arg8[%c0_21, %c0_22], %37 {strides = array<i32>} : memref<8x8xf32, #tpu.memory_space<vmem>>, vector<8x8xf32>,
    return
  }
  func.func @transform_0(%arg0: i32) -> (i32, i32) {
    %c0_i32 = arith.constant 0 : i32
    %c0_i32_0 = arith.constant 0 : i32
    return %arg0, %c0_i32 : i32, i32
  }
  func.func @transform_1(%arg0: i32) -> (i32, i32) {
    %c0_i32 = arith.constant 0 : i32
    %c0_i32_0 = arith.constant 0 : i32
    %c0_i32_1 = arith.constant 0 : i32
    return %c0_i32, %c0_i32_0 : i32, i32
  }
  func.func @transform_2(%arg0: i32) -> (i32, i32) {
    %c0_i32 = arith.constant 0 : i32
    %c0_i32_0 = arith.constant 0 : i32
    %c0_i32_1 = arith.constant 0 : i32
    return %c0_i32, %c0_i32_0 : i32, i32
  }
  func.func @transform_3(%arg0: i32) -> (i32, i32) {
    %c0_i32 = arith.constant 0 : i32
    %c0_i32_0 = arith.constant 0 : i32
    %c0_i32_1 = arith.constant 0 : i32
    return %c0_i32, %c0_i32_0 : i32, i32
  }
  func.func @transform_4(%arg0: i32) -> (i32, i32) {
    %c0_i32 = arith.constant 0 : i32
    %c0_i32_0 = arith.constant 0 : i32
    %c0_i32_1 = arith.constant 0 : i32
    return %c0_i32, %c0_i32_0 : i32, i32
  }
  func.func @transform_5(%arg0: i32) -> (i32, i32) {
    %c0_i32 = arith.constant 0 : i32
    %c0_i32_0 = arith.constant 0 : i32
    %c0_i32_1 = arith.constant 0 : i32
    return %c0_i32, %c0_i32_0 : i32, i32
  }
  func.func @transform_6(%arg0: i32) -> (i32, i32) {
    %c0_i32 = arith.constant 0 : i32
    %c0_i32_0 = arith.constant 0 : i32
    %c0_i32_1 = arith.constant 0 : i32
    return %c0_i32, %c0_i32_0 : i32, i32
  }
  func.func @transform_7(%arg0: i32) -> (i32, i32) {
    %c0_i32 = arith.constant 0 : i32
    %c0_i32_0 = arith.constant 0 : i32
    return %arg0, %c0_i32 : i32, i32
  }
}

</mosaic_0001>

<llo_original>
// kernel: tpu_custom_call.1
$region0: #{tpu_custom_call.1}
  #allocation0 [shape = 'u32[]', space=smem, size = 0x4, offset = 0x4, fixed_abs, tag = 'smem constant byte address 0x4 - core index']
  #allocation1 [shape = 'u32[72,128]{1,0:T(1,128)}', space=vmem, size = 0x9000, scoped, tag = 'internal scratch']
  %s0 = inlined_call_operand.hbm [shape: f32[8,32], index: 0, kind: input, shape index: {}]
  %s1 = inlined_call_operand.hbm [shape: bf16[32,128], index: 1, kind: input, shape index: {}]
  %s2 = inlined_call_operand.vmem [shape: f32[1,128], index: 2, kind: input, shape index: {}]
  %s3 = inlined_call_operand.vmem [shape: bf16[128,128], index: 3, kind: input, shape index: {}]
  %s4 = inlined_call_operand.vmem [shape: f32[1,128], index: 4, kind: input, shape index: {}]
  %s5 = inlined_call_operand.vmem [shape: bf16[128,8], index: 5, kind: input, shape index: {}]
  %s6 = inlined_call_operand.vmem [shape: f32[1,8], index: 6, kind: input, shape index: {}]
  %s7 = inlined_call_operand.hbm [shape: f32[8,8], index: 7, kind: output, shape index: {}]
  %s8 = sld [smem:[#allocation0]]
  $region46: #{tpu_custom_call.1} parent=0
    _
  %s10 = ssub.s32 1, %s8
  %s11 = scalar_select 0, %s10, %s8
  $region1: #{tpu_custom_call.1} parent=0
    #allocation2 [shape = 'u8[4096]{0}', space=vmem, size = 0x1000, scoped, tag = 'input window, operand 0, single buffered']
    #allocation3 [shape = 's32[1]{0}', space=sflag, size = 0x4, scoped, tag = 'scoped memory for tpu_custom_call.1']
    #allocation4 [shape = 's32[1]{0}', space=sflag, size = 0x4, scoped, tag = 'scoped memory for tpu_custom_call.1']
    #allocation5 [shape = 'u8[8192]{0}', space=vmem, size = 0x2000, scoped, tag = 'input window, operand 1, single buffered']
    #allocation6 [shape = 's32[1]{0}', space=sflag, size = 0x4, scoped, tag = 'scoped memory for tpu_custom_call.1']
    #allocation7 [shape = 'u8[4096]{0}', space=vmem, size = 0x1000, scoped, tag = 'output window, operand 0, single buffered']
    %12 = vsyncpa [#allocation3], 0
    %13 = vsyncpa [#allocation6], 0
    %14 = vsyncpa [#allocation4], 0
    // Predicated region
    $region2: #{tpu_custom_call.1} parent=1 // pred_check
      _
    $region3: #{tpu_custom_call.1} parent=1 // pred_check_branch
      %16 = sbr.rel (0) target = $region5
    $region4: #{tpu_custom_call.1} parent=1 // pred_region
      %18 = vsyncadd [#allocation3], 0
      %s20 = sshll.u32 %s0, 4
      %s21 = int_to_ptr.hbm [resolvable:$true] %s20
      %s22 = sshll.u32 [#allocation2], 4
      %s23 = int_to_ptr.vmem [resolvable:$true] %s22
      %25 = dma.hbm_to_vmem [thread:$0]  %s21, 128, %s23, [#allocation3]
    $region5: #{tpu_custom_call.1} parent=1 // pred_fallthru
      _
    // Predicated region
    $region6: #{tpu_custom_call.1} parent=1 // pred_check
      _
    $region7: #{tpu_custom_call.1} parent=1 // pred_check_branch
      %27 = sbr.rel (0) target = $region9
    $region8: #{tpu_custom_call.1} parent=1 // pred_region
      %29 = vsyncadd [#allocation6], 0
      %s30 = sshll.u32 %s1, 4
      %s31 = int_to_ptr.hbm [resolvable:$true] %s30
      %s32 = sshll.u32 [#allocation5], 4
      %s33 = int_to_ptr.vmem [resolvable:$true] %s32
      %38 = dma.hbm_to_vmem [thread:$0]  %s31, 256, %s33, [#allocation6], 64, 64, 4
    $region9: #{tpu_custom_call.1} parent=1 // pred_fallthru
      _
    // Predicated region
    $region10: #{tpu_custom_call.1} parent=1 // pred_check
      _
    $region11: #{tpu_custom_call.1} parent=1 // pred_check_branch
      %40 = sbr.rel (0) target = $region13
    $region12: #{tpu_custom_call.1} parent=1 // pred_region
      _
    $region13: #{tpu_custom_call.1} parent=1 // pred_fallthru
      _
    // Predicated region
    $region14: #{tpu_custom_call.1} parent=1 // pred_check
      _
    $region15: #{tpu_custom_call.1} parent=1 // pred_check_branch
      %42 = sbr.rel (0) target = $region17
    $region16: #{tpu_custom_call.1} parent=1 // pred_region
      _
    $region17: #{tpu_custom_call.1} parent=1 // pred_fallthru
      _
    // Predicated region
    $region18: #{tpu_custom_call.1} parent=1 // pred_check
      _
    $region19: #{tpu_custom_call.1} parent=1 // pred_check_branch
      %44 = sbr.rel (0) target = $region21
    $region20: #{tpu_custom_call.1} parent=1 // pred_region
      _
    $region21: #{tpu_custom_call.1} parent=1 // pred_fallthru
      _
    // Predicated region
    $region22: #{tpu_custom_call.1} parent=1 // pred_check
      _
    $region23: #{tpu_custom_call.1} parent=1 // pred_check_branch
      %46 = sbr.rel (0) target = $region25
    $region24: #{tpu_custom_call.1} parent=1 // pred_region
      _
    $region25: #{tpu_custom_call.1} parent=1 // pred_fallthru
      _
    // Predicated region
    $region26: #{tpu_custom_call.1} parent=1 // pred_check
      _
    $region27: #{tpu_custom_call.1} parent=1 // pred_check_branch
      %48 = sbr.rel (0) target = $region29
    $region28: #{tpu_custom_call.1} parent=1 // pred_region
      _
    $region29: #{tpu_custom_call.1} parent=1 // pred_fallthru
      _
    // Predicated region
    $region30: #{tpu_custom_call.1} parent=1 // pred_check
      _
    $region31: #{tpu_custom_call.1} parent=1 // pred_check_branch
      %50 = sbr.rel (0) target = $region33
    $region32: #{tpu_custom_call.1} parent=1 // pred_region
      %52 = dma.done [#allocation3], 128
    $region33: #{tpu_custom_call.1} parent=1 // pred_fallthru
      _
    // Predicated region
    $region34: #{tpu_custom_call.1} parent=1 // pred_check
      _
    $region35: #{tpu_custom_call.1} parent=1 // pred_check_branch
      %54 = sbr.rel (0) target = $region37
    $region36: #{tpu_custom_call.1} parent=1 // pred_region
      %56 = dma.done [#allocation6], 256
    $region37: #{tpu_custom_call.1} parent=1 // pred_fallthru
      _
    %v58 = vld [vmem:[#allocation2] sm:$0xff]
    %v59 = vpack.c.bf16 %v58, %v58
    %v60 = vld [vmem:[#allocation5] sm:$0xf]
    %v61 = vld [vmem:[#allocation5 + $0x4] sm:$0xf]
    %v62 = vld [vmem:[#allocation5 + $0x8] sm:$0xf]
    %v63 = vld [vmem:[#allocation5 + $0xc] sm:$0xf]
    %v64 = vld [vmem:[%s2] sm:$0x1]
    %v66 = vperm.slane %v64, 0
    %v72 = vunpack.c.l.b16 %v60
    %v73 = vunpack.c.l.b16 %v61
    %v74 = vunpack.c.l.b16 %v62
    %v75 = vunpack.c.l.b16 %v63
    %v76 = vpack.c.b16 %v73, %v72
    %v77 = vpack.c.b16 %v75, %v74
    %vm80 = vcmask 261120
    %v82 = vsel %vm80, %v59, 0
    %84 = vmatpush.bf16.msra.mxu0 0
    %85 = vmatpush.bf16.msra.mxu0 0
    %86 = vmatpush.bf16.msra.mxu0 0
    %87 = vmatpush.bf16.msra.mxu0 0
    %88 = vmatpush.bf16.msra.mxu0 0
    %89 = vmatpush.bf16.msra.mxu0 0
    %90 = vmatpush.bf16.msra.mxu0 %v77
    %91 = vmatpush.bf16.msra.mxu0 %v76
    %92 = vmatmul.bf16.gmra.mxu0 %v82
    %v93 = vpop.f32.mrf.mxu0
    %v94 = vadd.f32 %v66, %v93
    %v95 = vpop.f32.mrf.mxu0
    %96 = vdwg.mxu0
    %v97 = vmax.f32 %v94, 0.0
    %v98 = vpack.c.bf16 %v97, %v97
    %v99 = vld [vmem:[%s3] sm:$0xf]
    %v100 = vld [vmem:[%s3 + $0x4] sm:$0xf]
    %v101 = vld [vmem:[%s3 + $0x8] sm:$0xf]
    %v102 = vld [vmem:[%s3 + $0xc] sm:$0xf]
    %v103 = vld [vmem:[%s3 + $0x10] sm:$0xf]
    %v104 = vld [vmem:[%s3 + $0x14] sm:$0xf]
    %v105 = vld [vmem:[%s3 + $0x18] sm:$0xf]
    %v106 = vld [vmem:[%s3 + $0x1c] sm:$0xf]
    %v107 = vld [vmem:[%s3 + $0x20] sm:$0xf]
    %v108 = vld [vmem:[%s3 + $0x24] sm:$0xf]
    %v109 = vld [vmem:[%s3 + $0x28] sm:$0xf]
    %v110 = vld [vmem:[%s3 + $0x2c] sm:$0xf]
    %v111 = vld [vmem:[%s3 + $0x30] sm:$0xf]
    %v112 = vld [vmem:[%s3 + $0x34] sm:$0xf]
    %v113 = vld [vmem:[%s3 + $0x38] sm:$0xf]
    %v114 = vld [vmem:[%s3 + $0x3c] sm:$0xf]
    %v115 = vld [vmem:[%s4] sm:$0x1]
    %v117 = vperm.slane %v115, 0
    %v135 = vunpack.c.l.b16 %v99
    %v136 = vunpack.c.l.b16 %v100
    %v137 = vunpack.c.l.b16 %v101
    %v138 = vunpack.c.l.b16 %v102
    %v139 = vunpack.c.l.b16 %v103
    %v140 = vunpack.c.l.b16 %v104
    %v141 = vunpack.c.l.b16 %v105
    %v142 = vunpack.c.l.b16 %v106
    %v143 = vunpack.c.l.b16 %v107
    %v144 = vunpack.c.l.b16 %v108
    %v145 = vunpack.c.l.b16 %v109
    %v146 = vunpack.c.l.b16 %v110
    %v147 = vunpack.c.l.b16 %v111
    %v148 = vunpack.c.l.b16 %v112
    %v149 = vunpack.c.l.b16 %v113
    %v150 = vunpack.c.l.b16 %v114
    %v151 = vpack.c.b16 %v136, %v135
    %v152 = vpack.c.b16 %v138, %v137
    %v153 = vpack.c.b16 %v140, %v139
    %v154 = vpack.c.b16 %v142, %v141
    %v155 = vpack.c.b16 %v144, %v143
    %v156 = vpack.c.b16 %v146, %v145
    %v157 = vpack.c.b16 %v148, %v147
    %v158 = vpack.c.b16 %v150, %v149
    %167 = vmatpush.bf16.msra.mxu0 %v158
    %168 = vmatpush.bf16.msra.mxu0 %v157
    %169 = vmatpush.bf16.msra.mxu0 %v156
    %170 = vmatpush.bf16.msra.mxu0 %v155
    %171 = vmatpush.bf16.msra.mxu0 %v154
    %172 = vmatpush.bf16.msra.mxu0 %v153
    %173 = vmatpush.bf16.msra.mxu0 %v152
    %174 = vmatpush.bf16.msra.mxu0 %v151
    %175 = vmatmul.bf16.gmra.mxu0 %v98
    %v176 = vpop.f32.mrf.mxu0
    %v177 = vadd.f32 %v117, %v176
    %v178 = vpop.f32.mrf.mxu0
    %179 = vdwg.mxu0
    %v180 = vmul.f32 %v177, 0.5
    %v181 = vtanh.pop %v180
    %v182 = vadd.f32 %v181, 1.0
    %v183 = vmul.f32 %v182, 0.5
    %v184 = vpack.c.bf16 %v183, %v183
    %v185 = vld [vmem:[%s5] sm:$0xf]
    %v186 = vld [vmem:[%s5 + $0x4] sm:$0xf]
    %v187 = vld [vmem:[%s5 + $0x8] sm:$0xf]
    %v188 = vld [vmem:[%s5 + $0xc] sm:$0xf]
    %v189 = vld [vmem:[%s5 + $0x10] sm:$0xf]
    %v190 = vld [vmem:[%s5 + $0x14] sm:$0xf]
    %v191 = vld [vmem:[%s5 + $0x18] sm:$0xf]
    %v192 = vld [vmem:[%s5 + $0x1c] sm:$0xf]
    %v193 = vld [vmem:[%s5 + $0x20] sm:$0xf]
    %v194 = vld [vmem:[%s5 + $0x24] sm:$0xf]
    %v195 = vld [vmem:[%s5 + $0x28] sm:$0xf]
    %v196 = vld [vmem:[%s5 + $0x2c] sm:$0xf]
    %v197 = vld [vmem:[%s5 + $0x30] sm:$0xf]
    %v198 = vld [vmem:[%s5 + $0x34] sm:$0xf]
    %v199 = vld [vmem:[%s5 + $0x38] sm:$0xf]
    %v200 = vld [vmem:[%s5 + $0x3c] sm:$0xf]
    %v201 = vld [vmem:[%s6] sm:$0x1]
    %v203 = vperm.slane %v201, 0
    %v221 = vunpack.c.l.b16 %v185
    %v222 = vunpack.c.l.b16 %v186
    %v223 = vunpack.c.l.b16 %v187
    %v224 = vunpack.c.l.b16 %v188
    %v225 = vunpack.c.l.b16 %v189
    %v226 = vunpack.c.l.b16 %v190
    %v227 = vunpack.c.l.b16 %v191
    %v228 = vunpack.c.l.b16 %v192
    %v229 = vunpack.c.l.b16 %v193
    %v230 = vunpack.c.l.b16 %v194
    %v231 = vunpack.c.l.b16 %v195
    %v232 = vunpack.c.l.b16 %v196
    %v233 = vunpack.c.l.b16 %v197
    %v234 = vunpack.c.l.b16 %v198
    %v235 = vunpack.c.l.b16 %v199
    %v236 = vunpack.c.l.b16 %v200
    %v237 = vpack.c.b16 %v222, %v221
    %v238 = vpack.c.b16 %v224, %v223
    %v239 = vpack.c.b16 %v226, %v225
    %v240 = vpack.c.b16 %v228, %v227
    %v241 = vpack.c.b16 %v230, %v229
    %v242 = vpack.c.b16 %v232, %v231
    %v243 = vpack.c.b16 %v234, %v233
    %v244 = vpack.c.b16 %v236, %v235
    %253 = vmatpush.bf16.msra.mxu0 %v244
    %254 = vmatpush.bf16.msra.mxu0 %v243
    %255 = vmatpush.bf16.msra.mxu0 %v242
    %256 = vmatpush.bf16.msra.mxu0 %v241
    %257 = vmatpush.bf16.msra.mxu0 %v240
    %258 = vmatpush.bf16.msra.mxu0 %v239
    %259 = vmatpush.bf16.msra.mxu0 %v238
    %260 = vmatpush.bf16.msra.mxu0 %v237
    %261 = vmatmul.bf16.gmra.mxu0 %v184
    %v262 = vpop.f32.mrf.mxu0
    %v263 = vadd.f32 %v203, %v262
    %v264 = vpop.f32.mrf.mxu0
    %265 = vdwg.mxu0
    %vm266 = vcmask 64512
    %v267 = vsel %vm266, %v263, -inf
    %268 = vmax.xlane.f32.xlu0 %v267
    %v269 = vpop.xlane.xlu0 %268
    %v270 = vsub.f32 %v263, %v269
    %v271 = vmul.f32 %v270, 1.442695
    %v272 = vpow.pop %v271
    %v273 = vsel %vm266, %v272, 0.0
    %274 = vadd.xlane.f32.xlu0 %v273
    %v275 = vpop.xlane.xlu0 %274
    %v276 = vlog2.pop %v275
    %v277 = vmul.f32 %v276, 0.6931472
    %v278 = vsub.f32 %v270, %v277
    %279 = vst.msk [vmem:[#allocation7] sm:$0xff] %vm266, %v278
    // Predicated region
    $region38: #{tpu_custom_call.1} parent=1 // pred_check
      _
    $region39: #{tpu_custom_call.1} parent=1 // pred_check_branch
      %281 = sbr.rel (0) target = $region41
    $region40: #{tpu_custom_call.1} parent=1 // pred_region
      %283 = vsyncadd [#allocation4], 0
      %s285 = sshll.u32 [#allocation7], 4
      %s286 = int_to_ptr.vmem [resolvable:$true] %s285
      %s287 = sshll.u32 %s7, 4
      %s288 = int_to_ptr.hbm [resolvable:$true] %s287
      %290 = dma.vmem_to_hbm [thread:$0]  %s286, 128, %s288, [#allocation4]
    $region41: #{tpu_custom_call.1} parent=1 // pred_fallthru
      _
    // Predicated region
    $region42: #{tpu_custom_call.1} parent=1 // pred_check
      _
    $region43: #{tpu_custom_call.1} parent=1 // pred_check_branch
      %292 = sbr.rel (0) target = $region45
    $region44: #{tpu_custom_call.1} parent=1 // pred_region
      %294 = dma.done [#allocation4], 128
    $region45: #{tpu_custom_call.1} parent=1 // pred_fallthru
      _
    %295 = vsyncpa [#allocation3], 1
    %296 = vsyncpa [#allocation6], 1
    %297 = vsyncpa [#allocation4], 1

</llo_original>
